<compile_context>
chip_gen: v5e
topology: v5e:2x2
jax: 0.10.0
libtpu: 0.0.40
codegen_flags: <defaults>
</compile_context>

<pallas_src>
from functools import partial

import numpy as np
import jax
import jax.numpy as jnp
from jax.experimental import pallas as pl
from jax.experimental.pallas import tpu as pltpu


# ----------------------------- operator construction -----------------------------

def _box_halving_matrix(n: int) -> np.ndarray:
    """Linear operator for a PIL Image.BOX resize that halves a dimension."""
    m = n // 2
    a = np.zeros((m, n), dtype=np.float32)
    idx = np.arange(m)
    a[idx, 2 * idx] = 0.5
    a[idx, 2 * idx + 1] = 0.5
    return a


def _num_halvings(h: int, w: int, resolution: int):
    k = 0
    while min(h, w) >= 2 * resolution:
        h //= 2
        w //= 2
        k += 1
    return k, h, w


def _resize_crop_matrix(n_in: int, resolution: int, n_halvings: int) -> np.ndarray:
    """Compose cascaded box halvings + CenterCrop into a single (S, n_in) matrix."""
    a = np.eye(n_in, dtype=np.float32)
    n = n_in
    for _ in range(n_halvings):
        a = _box_halving_matrix(n) @ a
        n //= 2
    # TODO(synk): PIL's final BICUBIC resize (non-power-of-two scales) and per-step
    # uint8 rounding inside cascaded_resize are not reproduced by this float operator.
    top = int(round((n - resolution) / 2.0))  # torchvision CenterCrop convention
    return a[top:top + resolution]


# ----------------------------------- kernels --------------------------------------

def _kron_kernel(x_ref, kt_ref, o_ref, *, shift):
    # x_ref : (TB, H*W)  uint8 planes
    # kt_ref: (H*W, S*S) f32, kron(A_h, A_w)^T with the (max-min)/255 scale pre-folded
    # o_ref : (TB, S*S)  f32  (lane-dense store)
    x = x_ref[...].astype(jnp.float32)                       # u8 -> f32 inside kernel
    o_ref[...] = jnp.dot(x, kt_ref[...],
                         preferred_element_type=jnp.float32) + shift


def _separable_kernel(x_ref, awt_ref, ah_ref, o_ref, *, shift):
    # x_ref : (TB, H, W) uint8 planes
    # awt_ref: (W, S) f32 (scale pre-folded);  ah_ref: (S, H) f32
    # o_ref : (TB, S, S) f32
    tb, h, w = x_ref.shape
    s = awt_ref.shape[1]
    x = x_ref[...].astype(jnp.float32)                       # (TB, H, W)
    t = jnp.dot(x.reshape(tb * h, w), awt_ref[...],
                preferred_element_type=jnp.float32)          # (TB*H, S)
    t = t.reshape(tb, h, s)                                  # (TB, H, S)
    ah_b = jnp.broadcast_to(ah_ref[...], (tb, s, h))         # shared row operator
    y = jnp.einsum('bih,bhj->bij', ah_b, t,
                   preferred_element_type=jnp.float32)       # (TB, S, S)
    o_ref[...] = y + shift


# ----------------------------------- wrapper --------------------------------------

_VMEM_DATA_BUDGET = 16 * 1024 * 1024      # pipelined data buffers; safe on v7x/v5e
_KRON_OPERATOR_LIMIT = 8 * 1024 * 1024    # dense kron operator must stay VMEM-resident


def _round_up(x: int, m: int) -> int:
    return (x + m - 1) // m * m


def _choose_planes_per_block(p8: int, bytes_per_plane: int) -> int:
    tb = (_VMEM_DATA_BUDGET // max(bytes_per_plane, 1)) // 8 * 8
    tb = int(max(8, min(tb, p8, 1024)))
    # keep at least two grid steps when possible so both v7x TensorCores get work
    if tb >= p8 and p8 >= 16:
        tb = max(8, (p8 // 2) // 8 * 8)
    return tb


def dalle2_image_transform(images_u8, image_size: int = 64,
                           image_min: float = -1.0, image_max: float = 1.0,
                           method: str = "auto"):
    """images_u8: (N, H, W, C) uint8 batch (stand-in for a list of PIL images).

    Returns (N, C, image_size, image_size) float32 in [image_min, image_max],
    matching torch.stack([Dalle2ImageTransform(...)(img) for img in images]).
    """
    assert images_u8.dtype == np.uint8
    N, H, W, C = images_u8.shape
    S = image_size

    k, h_r, w_r = _num_halvings(H, W, S)
    # TODO(synk): non-power-of-two scale factors need PIL's final BICUBIC resize.
    assert min(h_r, w_r) == S, "demo restriction: cascaded halving must land on image_size"

    scale = (image_max - image_min) / 255.0
    shift = float(image_min)
    A_h = _resize_crop_matrix(H, S, k)            # (S, H)
    A_w = _resize_crop_matrix(W, S, k)            # (S, W)

    kron_bytes = (H * W) * (S * S) * 4
    if method == "auto":
        method = "kron" if kron_bytes <= _KRON_OPERATOR_LIMIT else "separable"

    # uint8 HWC -> plane-major CHW (done on uint8: 4x cheaper than the old f32 copy);
    # /255 and the f32 cast happen inside the kernel.
    planes = jnp.transpose(images_u8, (0, 3, 1, 2)).reshape(N * C, H, W)
    P = N * C
    P8 = _round_up(P, 8)

    if method == "kron":
        kt = jnp.asarray(np.kron(A_h, A_w).T * scale)             # (H*W, S*S)
        bytes_per_plane = 2 * H * W + 4 * H * W + 2 * 4 * S * S   # dbuf u8 in + cast + dbuf out
        TB = _choose_planes_per_block(P8, bytes_per_plane)
        P_pad = _round_up(P8, TB)
        x2d = planes.reshape(P, H * W)
        if P_pad != P:
            x2d = jnp.pad(x2d, ((0, P_pad - P), (0, 0)))
        vmem_need = kron_bytes + TB * bytes_per_plane + (4 << 20)
        out = pl.pallas_call(
            partial(_kron_kernel, shift=shift),
            out_shape=jax.ShapeDtypeStruct((P_pad, S * S), jnp.float32),
            grid_spec=pltpu.PrefetchScalarGridSpec(
                num_scalar_prefetch=0,
                grid=(P_pad // TB,),
                in_specs=[
                    pl.BlockSpec((TB, H * W), lambda i: (i, 0)),         # plane block
                    pl.BlockSpec((H * W, S * S), lambda i: (0, 0)),      # resident operator
                ],
                out_specs=pl.BlockSpec((TB, S * S), lambda i: (i, 0)),   # lane-dense
            ),
            compiler_params=pltpu.CompilerParams(
                dimension_semantics=("parallel",),
                vmem_limit_bytes=int(min(max(vmem_need, 16 << 20), 48 << 20))),
        )(x2d, kt)
        out = out[:P].reshape(N, C, S, S)
    else:  # separable two-matmul path (large planes / v7x VMEM fallback)
        awt = jnp.asarray((A_w * scale).T)                        # (W, S)
        ah = jnp.asarray(A_h)                                     # (S, H)
        bytes_per_plane = 2 * H * W + 4 * H * W + 4 * H * S + 2 * 4 * S * S
        TB = _choose_planes_per_block(P8, bytes_per_plane)
        P_pad = _round_up(P8, TB)
        x3d = planes
        if P_pad != P:
            x3d = jnp.pad(x3d, ((0, P_pad - P), (0, 0), (0, 0)))
        vmem_need = TB * bytes_per_plane + (W * S + S * H) * 4 + (4 << 20)
        out = pl.pallas_call(
            partial(_separable_kernel, shift=shift),
            out_shape=jax.ShapeDtypeStruct((P_pad, S, S), jnp.float32),
            grid_spec=pltpu.PrefetchScalarGridSpec(
                num_scalar_prefetch=0,
                grid=(P_pad // TB,),
                in_specs=[
                    pl.BlockSpec((TB, H, W), lambda i: (i, 0, 0)),       # plane block
                    pl.BlockSpec((W, S), lambda i: (0, 0)),              # resident A_w^T
                    pl.BlockSpec((S, H), lambda i: (0, 0)),              # resident A_h
                ],
                out_specs=pl.BlockSpec((TB, S, S), lambda i: (i, 0, 0)),
            ),
            compiler_params=pltpu.CompilerParams(
                dimension_semantics=("parallel",),
                vmem_limit_bytes=int(min(max(vmem_need, 16 << 20), 48 << 20))),
        )(x3d, awt, ah)
        out = out[:P].reshape(N, C, S, S)
    return out


# ------------------------------------ demo -----------------------------------------

if __name__ == "__main__":
    key = jax.random.PRNGKey(0)
    N, H, W, C = 4, 32, 32, 3
    S = 16

    # synthetic "PIL" batch: uint8 HWC images
    images = jax.random.randint(key, (N, H, W, C), 0, 256, dtype=jnp.int32)
    images = images.astype(jnp.uint8)

    out_kron = dalle2_image_transform(images, image_size=S, method="kron")
    out_sep = dalle2_image_transform(images, image_size=S, method="separable")
    out_auto = dalle2_image_transform(images, image_size=S)   # auto -> kron at this size
    jax.block_until_ready(out_kron)
    jax.block_until_ready(out_sep)
    jax.block_until_ready(out_auto)

    # numpy reference using the same linearized resize/crop (general k, not hardcoded)
    k, _, _ = _num_halvings(H, W, S)
    A_h = _resize_crop_matrix(H, S, k)
    A_w = _resize_crop_matrix(W, S, k)
    x_np = np.transpose(np.asarray(images), (0, 3, 1, 2)).astype(np.float32)
    ref = np.einsum('ih,nchw,jw->ncij', A_h, x_np, A_w) * (2.0 / 255.0) - 1.0

    for o in (out_kron, out_sep, out_auto):
        assert o.shape == (N, C, S, S)
        assert o.dtype == jnp.float32
        np.testing.assert_allclose(np.asarray(o), ref, rtol=1e-4, atol=1e-4)
        assert float(jnp.min(o)) >= -1.0 - 1e-4 and float(jnp.max(o)) <= 1.0 + 1e-4

    print("KERNEL_OK")
</pallas_src>

<mosaic_0001>
module attributes {stable_mosaic.version = 11 : i64} {
  func.func @_kron_kernel(%arg0: i32, %arg1: memref<8x1024xi8, #tpu.memory_space<vmem>>, %arg2: memref<1024x256xf32, #tpu.memory_space<vmem>>, %arg3: memref<8x256xf32, #tpu.memory_space<vmem>>) attributes {dimension_semantics = [#tpu.dimension_semantics<parallel>], iteration_bounds = array<i64: 2>, scalar_prefetch = 0 : i64, scratch_operands = 0 : i64, tpu.core_type = #tpu.core_type<tc>, window_params = [{transform_indices = @transform_0, window_bounds = array<i64: 8, 1024>}, {pipeline_mode = #tpu.pipeline_mode<synchronous>, transform_indices = @transform_1, window_bounds = array<i64: 1024, 256>}, {transform_indices = @transform_2, window_bounds = array<i64: 8, 256>}]} {
    %c0 = arith.constant 0 : index
    %c0_0 = arith.constant 0 : index
    %0 = vector.load %arg1[%c0, %c0_0] : memref<8x1024xi8, #tpu.memory_space<vmem>>, vector<8x1024xi8>
    %1 = arith.uitofp %0 : vector<8x1024xi8> to vector<8x1024xf32>
    %c0_1 = arith.constant 0 : index
    %c0_2 = arith.constant 0 : index
    %2 = vector.load %arg2[%c0_1, %c0_2] : memref<1024x256xf32, #tpu.memory_space<vmem>>, vector<1024x256xf32>
    %cst = arith.constant dense<0.000000e+00> : vector<8x256xf32>
    %3 = tpu.matmul %1, %2, %cst {dimension_numbers = #tpu.dot_dimension_numbers<[1], [0], [0], [1], [0, 0, 1, 1], [], []>} : vector<8x1024xf32>, vector<1024x256xf32>, vector<8x256xf32> -> vector<8x256xf32>
    %cst_3 = arith.constant -1.000000e+00 : f32
    %4 = vector.broadcast %cst_3 : f32 to vector<8x256xf32>
    %5 = arith.addf %3, %4 : vector<8x256xf32>
    %c0_4 = arith.constant 0 : index
    %c0_5 = arith.constant 0 : index
    %6 = vector.load %arg3[%c0_4, %c0_5] : memref<8x256xf32, #tpu.memory_space<vmem>>, vector<8x256xf32>
    tpu.vector_store %arg3[%c0_4, %c0_5], %5 {strides = array<i32>} : memref<8x256xf32, #tpu.memory_space<vmem>>, vector<8x256xf32>,
    return
  }
  func.func @transform_0(%arg0: i32) -> (i32, i32) {
    %c0_i32 = arith.constant 0 : i32
    %c0_i32_0 = arith.constant 0 : i32
    return %arg0, %c0_i32 : i32, i32
  }
  func.func @transform_1(%arg0: i32) -> (i32, i32) {
    %c0_i32 = arith.constant 0 : i32
    %c0_i32_0 = arith.constant 0 : i32
    %c0_i32_1 = arith.constant 0 : i32
    return %c0_i32, %c0_i32_0 : i32, i32
  }
  func.func @transform_2(%arg0: i32) -> (i32, i32) {
    %c0_i32 = arith.constant 0 : i32
    %c0_i32_0 = arith.constant 0 : i32
    return %arg0, %c0_i32 : i32, i32
  }
}

</mosaic_0001>

<llo_original>
// kernel: tpu_custom_call.1
$region0: #{tpu_custom_call.1}
  #allocation0 [shape = 'u32[]', space=smem, size = 0x4, offset = 0x4, fixed_abs, tag = 'smem constant byte address 0x4 - core index']
  #allocation1 [shape = 'u32[72,128]{1,0:T(1,128)}', space=vmem, size = 0x9000, scoped, tag = 'internal scratch']
  %s0 = inlined_call_operand.hbm [shape: u8[16,1024], index: 0, kind: input, shape index: {}]
  %s1 = inlined_call_operand.hbm [shape: f32[1024,256], index: 1, kind: input, shape index: {}]
  %s2 = inlined_call_operand.hbm [shape: f32[16,256], index: 2, kind: output, shape index: {}]
  %s3 = sld [smem:[#allocation0]]
  $region49: #{tpu_custom_call.1} parent=0
    _
  %s5 = ssub.s32 1, %s3
  %s6 = scalar_select 0, %s5, %s3
  $region1: #{tpu_custom_call.1} parent=0
    #allocation2 [shape = 'u8[16384]{0}', space=vmem, size = 0x4000, scoped, tag = 'input window, operand 0']
    #allocation3 [shape = 's32[2]{0}', space=sflag, size = 0x8, scoped, tag = 'scoped memory for tpu_custom_call.1']
    #allocation4 [shape = 's32[2]{0}', space=sflag, size = 0x8, scoped, tag = 'scoped memory for tpu_custom_call.1']
    #allocation5 [shape = 'u8[1048576]{0}', space=vmem, size = 0x100000, scoped, tag = 'input window, operand 1, single buffered']
    #allocation6 [shape = 's32[1]{0}', space=sflag, size = 0x4, scoped, tag = 'scoped memory for tpu_custom_call.1']
    #allocation7 [shape = 'u8[16384]{0}', space=vmem, size = 0x4000, scoped, tag = 'output window, operand 0']
    %7 = vsyncpa [#allocation3], 0
    %s8 = scalar_lea.sflag [#allocation3], 1
    %9 = vsyncpa %s8, 0
    %10 = vsyncpa [#allocation6], 0
    %11 = vsyncpa [#allocation4], 0
    %s12 = scalar_lea.sflag [#allocation4], 1
    %13 = vsyncpa %s12, 0
    loop: start=0, step=1, limit=4
    $region2: #{tpu_custom_call.1} parent=1 // loop_pre_header
      _
    $region3: #{tpu_custom_call.1} parent=1 // loop_header
      %s15 = sphi 0, %s19
      %p16 = scmp.ge.s32.totalorder %s15, 4
      %s25 = sphi 0, %s27
      %s28 = sphi 0, %s25
      %s29 = sphi 0, %s28
      %s45 = sphi 0, %s29
      %s49 = sphi 0, %s49
      %s51 = sphi 0, %s49
      %s52 = sphi 0, %s51
      %s66 = sphi 0, %s52
      %s72 = sphi 0, %s74
      %s75 = sphi 0, %s72
      %s76 = sphi 0, %s75
      %s92 = sphi 0, %s76
    $region4: #{tpu_custom_call.1} parent=1 // loop_header_branch
      %18 = sbr.rel (%p16) target = $region8
    $region5: #{tpu_custom_call.1} parent=1 // loop_body
      %s20 = ssub.s32 %s15, 1
      %s21 = ssub.s32 %s15, 2
      %s22 = sadd.s32 %s15, 1
      %s23 = ssub.s32 %s15, %s22
      %p24 = scmp.eq.s32.totalorder %s23, 0
      %s26 = sadd.s32 %s25, 1
      %s27 = scalar_select %p24, %s25, %s26
      %p30 = pneg %p24
      %p31 = scmp.eq.s32.totalorder %s15, 1
      %p32 = por %p30, %p31
      %p33 = scmp.ne.s32.totalorder %s25, %s28
      %p34 = scmp.eq.s32.totalorder %s15, 0
      %p35 = por %p33, %p34
      %p36 = scmp.ne.s32.totalorder %s25, %s28
      %p37 = scmp.eq.s32.totalorder %s20, 1
      %p38 = por %p36, %p37
      %p39 = scmp.ne.s32.totalorder %s28, %s29
      %p40 = scmp.eq.s32.totalorder %s20, 0
      %p41 = por %p39, %p40
      %p42 = scmp.ne.s32.totalorder %s28, %s29
      %p43 = scmp.eq.s32.totalorder %s21, 1
      %p44 = por %p42, %p43
      %p46 = scmp.ne.s32.totalorder %s29, %s45
      %p47 = scmp.eq.s32.totalorder %s21, 0
      %p48 = por %p46, %p47
      %s50 = sadd.s32 %s49, 1
      %p53 = scmp.eq.s32.totalorder %s15, 1
      %p54 = scmp.ne.s32.totalorder %s49, %s51
      %p55 = scmp.eq.s32.totalorder %s15, 0
      %p56 = por %p54, %p55
      %p57 = scmp.ne.s32.totalorder %s49, %s51
      %p58 = scmp.eq.s32.totalorder %s20, 1
      %p59 = por %p57, %p58
      %p60 = scmp.ne.s32.totalorder %s51, %s52
      %p61 = scmp.eq.s32.totalorder %s20, 0
      %p62 = por %p60, %p61
      %p63 = scmp.ne.s32.totalorder %s51, %s52
      %p64 = scmp.eq.s32.totalorder %s21, 1
      %p65 = por %p63, %p64
      %p67 = scmp.ne.s32.totalorder %s52, %s66
      %p68 = scmp.eq.s32.totalorder %s21, 0
      %p69 = por %p67, %p68
      %s70 = ssub.s32 %s15, %s22
      %p71 = scmp.eq.s32.totalorder %s70, 0
      %s73 = sadd.s32 %s72, 1
      %s74 = scalar_select %p71, %s72, %s73
      %p77 = pneg %p71
      %p78 = scmp.eq.s32.totalorder %s15, 1
      %p79 = por %p77, %p78
      %p80 = scmp.ne.s32.totalorder %s72, %s75
      %p81 = scmp.eq.s32.totalorder %s15, 0
      %p82 = por %p80, %p81
      %p83 = scmp.ne.s32.totalorder %s72, %s75
      %p84 = scmp.eq.s32.totalorder %s20, 1
      %p85 = por %p83, %p84
      %p86 = scmp.ne.s32.totalorder %s75, %s76
      %p87 = scmp.eq.s32.totalorder %s20, 0
      %p88 = por %p86, %p87
      %p89 = scmp.ne.s32.totalorder %s75, %s76
      %p90 = scmp.eq.s32.totalorder %s21, 1
      %p91 = por %p89, %p90
      %p93 = scmp.ne.s32.totalorder %s76, %s92
      %p94 = scmp.eq.s32.totalorder %s21, 0
      %p95 = por %p93, %p94
      %p96 = scmp.le.s32.totalorder 1, %s15
      %p97 = scmp.lt.s32.totalorder %s15, 3
      %p98 = pnand %p96, %p97
      %p99 = pneg %p98
      // Predicated region
      $region9: #{tpu_custom_call.1} parent=5 // pred_check
        _
      $region10: #{tpu_custom_call.1} parent=5 // pred_check_branch
        %101 = sbr.rel (%p98) target = $region12
      $region11: #{tpu_custom_call.1} parent=5 // pred_region
        %s102 = ssub.s32 %s15, 1
        // Predicated region
        $region13: #{tpu_custom_call.1} parent=11 // pred_check
          %p103 = pneg %p62
        $region14: #{tpu_custom_call.1} parent=11 // pred_check_branch
          %105 = sbr.rel (%p103) target = $region16
        $region15: #{tpu_custom_call.1} parent=11 // pred_region
          %107 = vsyncadd [#allocation6], 0
          %s108 = sshll.u32 %s1, 4
          %s109 = int_to_ptr.hbm [resolvable:$true] %s108
          %s110 = sshll.u32 [#allocation5], 4
          %s111 = int_to_ptr.vmem [resolvable:$true] %s110
          %116 = dma.hbm_to_vmem [thread:$0]  %s109, 32768, %s111, [#allocation6], 256, 256, 16
        $region16: #{tpu_custom_call.1} parent=11 // pred_fallthru
          _
      $region12: #{tpu_custom_call.1} parent=5 // pred_fallthru
        _
      %p117 = scmp.lt.s32.totalorder %s15, 2
      // Predicated region
      $region17: #{tpu_custom_call.1} parent=5 // pred_check
        %p118 = pneg %p117
      $region18: #{tpu_custom_call.1} parent=5 // pred_check_branch
        %120 = sbr.rel (%p118) target = $region20
      $region19: #{tpu_custom_call.1} parent=5 // pred_region
        // Predicated region
        $region21: #{tpu_custom_call.1} parent=19 // pred_check
          %p121 = pneg %p35
        $region22: #{tpu_custom_call.1} parent=19 // pred_check_branch
          %123 = sbr.rel (%p121) target = $region24
        $region23: #{tpu_custom_call.1} parent=19 // pred_region
          %s124 = sand.u32 %s25, 1
          %s125 = scalar_lea.sflag [#allocation3], %s124
          %s126 = sand.u32 %s25, 1
          %s127 = smul.addr %s126, 16
          %s128 = scalar_lea.vmem [#allocation2], %s127
          %130 = vsyncadd %s125, 0
          %s131 = smul.addr %s15, 8
          %s132 = smul.addr %s131, 2
          %s133 = scalar_lea.hbm %s0, %s132
          %s135 = sshll.u32 %s133, 4
          %s136 = int_to_ptr.hbm [resolvable:$true] %s135
          %s137 = sshll.u32 %s128, 4
          %s138 = int_to_ptr.vmem [resolvable:$true] %s137
          %140 = dma.hbm_to_vmem [thread:$0]  %s136, 256, %s138, %s125
        $region24: #{tpu_custom_call.1} parent=19 // pred_fallthru
          _
      $region20: #{tpu_custom_call.1} parent=5 // pred_fallthru
        _
      %p141 = scmp.le.s32.totalorder 1, %s15
      %p142 = scmp.lt.s32.totalorder %s15, 3
      %p143 = pnand %p141, %p142
      %p144 = pneg %p143
      // Predicated region
      $region25: #{tpu_custom_call.1} parent=5 // pred_check
        _
      $region26: #{tpu_custom_call.1} parent=5 // pred_check_branch
        %146 = sbr.rel (%p143) target = $region28
      $region27: #{tpu_custom_call.1} parent=5 // pred_region
        %s147 = ssub.s32 %s15, 1
        %s148 = sand.u32 %s28, 1
        %s149 = scalar_lea.sflag [#allocation3], %s148
        %s150 = sand.u32 %s28, 1
        %s151 = smul.addr %s150, 16
        %s152 = scalar_lea.vmem [#allocation2], %s151
        // Predicated region
        $region29: #{tpu_custom_call.1} parent=27 // pred_check
          %p153 = pneg %p41
        $region30: #{tpu_custom_call.1} parent=27 // pred_check_branch
          %155 = sbr.rel (%p153) target = $region32
        $region31: #{tpu_custom_call.1} parent=27 // pred_region
          %157 = dma.done %s149, 256
        $region32: #{tpu_custom_call.1} parent=27 // pred_fallthru
          _
        // Predicated region
        $region33: #{tpu_custom_call.1} parent=27 // pred_check
          %p158 = pneg %p62
        $region34: #{tpu_custom_call.1} parent=27 // pred_check_branch
          %160 = sbr.rel (%p158) target = $region36
        $region35: #{tpu_custom_call.1} parent=27 // pred_region
          %162 = dma.done [#allocation6], 32768
        $region36: #{tpu_custom_call.1} parent=27 // pred_fallthru
          _
        %s163 = sand.u32 %s28, 1
        %s164 = scalar_lea.sflag [#allocation3], %s163
        %s165 = sand.u32 %s28, 1
        %s166 = smul.addr %s165, 16
        %s167 = scalar_lea.vmem [#allocation2], %s166
        %p168 = pneg %p41
        %p169 = pneg %p38
        %p170 = pneg %p62
        %p171 = pneg %p59
        %p172 = pneg %p88
        %p173 = pneg %p85
        %s174 = sand.u32 %s75, 1
        %s175 = scalar_lea.sflag [#allocation4], %s174
        %s176 = sand.u32 %s75, 1
        %s177 = smul.addr %s176, 16
        %s178 = scalar_lea.vmem [#allocation7], %s177
        %v179 = vld [vmem:[%s152] sm:$0xff]
        %v180 = vld [vmem:[%s152 + $0x8] sm:$0xff]
        %v181 = vunpack.c.0.s8 %v179
        %v182 = vunpack.c.1.s8 %v179
        %v183 = vunpack.c.2.s8 %v179
        %v184 = vunpack.c.3.s8 %v179
        %v185 = vunpack.c.0.s8 %v180
        %v186 = vunpack.c.1.s8 %v180
        %v187 = vunpack.c.2.s8 %v180
        %v188 = vunpack.c.3.s8 %v180
        %v189 = vand.u32 %v181, 255
        %v190 = vand.u32 %v182, 255
        %v191 = vand.u32 %v183, 255
        %v192 = vand.u32 %v184, 255
        %v193 = vand.u32 %v185, 255
        %v194 = vand.u32 %v186, 255
        %v195 = vand.u32 %v187, 255
        %v196 = vand.u32 %v188, 255
        %v197 = vcvt.s32.f32 %v189
        %v198 = vcvt.s32.f32 %v190
        %v199 = vcvt.s32.f32 %v191
        %v200 = vcvt.s32.f32 %v192
        %v201 = vcvt.s32.f32 %v193
        %v202 = vcvt.s32.f32 %v194
        %v203 = vcvt.s32.f32 %v195
        %v204 = vcvt.s32.f32 %v196
        %v205 = vld [vmem:[#allocation5] sm:$0xff]
        %v206 = vld [vmem:[#allocation5 + $0x8] sm:$0xff]
        %v207 = vld [vmem:[#allocation5 + $0x10] sm:$0xff]
        %v208 = vld [vmem:[#allocation5 + $0x18] sm:$0xff]
        %v209 = vld [vmem:[#allocation5 + $0x20] sm:$0xff]
        %v210 = vld [vmem:[#allocation5 + $0x28] sm:$0xff]
        %v211 = vld [vmem:[#allocation5 + $0x30] sm:$0xff]
        %v212 = vld [vmem:[#allocation5 + $0x38] sm:$0xff]
        %v213 = vld [vmem:[#allocation5 + $0x40] sm:$0xff]
        %v214 = vld [vmem:[#allocation5 + $0x48] sm:$0xff]
        %v215 = vld [vmem:[#allocation5 + $0x50] sm:$0xff]
        %v216 = vld [vmem:[#allocation5 + $0x58] sm:$0xff]
        %v217 = vld [vmem:[#allocation5 + $0x60] sm:$0xff]
        %v218 = vld [vmem:[#allocation5 + $0x68] sm:$0xff]
        %v219 = vld [vmem:[#allocation5 + $0x70] sm:$0xff]
        %v220 = vld [vmem:[#allocation5 + $0x78] sm:$0xff]
        %v221 = vld [vmem:[#allocation5 + $0x80] sm:$0xff]
        %v222 = vld [vmem:[#allocation5 + $0x88] sm:$0xff]
        %v223 = vld [vmem:[#allocation5 + $0x90] sm:$0xff]
        %v224 = vld [vmem:[#allocation5 + $0x98] sm:$0xff]
        %v225 = vld [vmem:[#allocation5 + $0xa0] sm:$0xff]
        %v226 = vld [vmem:[#allocation5 + $0xa8] sm:$0xff]
        %v227 = vld [vmem:[#allocation5 + $0xb0] sm:$0xff]
        %v228 = vld [vmem:[#allocation5 + $0xb8] sm:$0xff]
        %v229 = vld [vmem:[#allocation5 + $0xc0] sm:$0xff]
        %v230 = vld [vmem:[#allocation5 + $0xc8] sm:$0xff]
        %v231 = vld [vmem:[#allocation5 + $0xd0] sm:$0xff]
        %v232 = vld [vmem:[#allocation5 + $0xd8] sm:$0xff]
        %v233 = vld [vmem:[#allocation5 + $0xe0] sm:$0xff]
        %v234 = vld [vmem:[#allocation5 + $0xe8] sm:$0xff]
        %v235 = vld [vmem:[#allocation5 + $0xf0] sm:$0xff]
        %v236 = vld [vmem:[#allocation5 + $0xf8] sm:$0xff]
        %v237 = vld [vmem:[#allocation5 + $0x100] sm:$0xff]
        %v238 = vld [vmem:[#allocation5 + $0x108] sm:$0xff]
        %v239 = vld [vmem:[#allocation5 + $0x110] sm:$0xff]
        %v240 = vld [vmem:[#allocation5 + $0x118] sm:$0xff]
        %v241 = vld [vmem:[#allocation5 + $0x120] sm:$0xff]
        %v242 = vld [vmem:[#allocation5 + $0x128] sm:$0xff]
        %v243 = vld [vmem:[#allocation5 + $0x130] sm:$0xff]
        %v244 = vld [vmem:[#allocation5 + $0x138] sm:$0xff]
        %v245 = vld [vmem:[#allocation5 + $0x140] sm:$0xff]
        %v246 = vld [vmem:[#allocation5 + $0x148] sm:$0xff]
        %v247 = vld [vmem:[#allocation5 + $0x150] sm:$0xff]
        %v248 = vld [vmem:[#allocation5 + $0x158] sm:$0xff]
        %v249 = vld [vmem:[#allocation5 + $0x160] sm:$0xff]
        %v250 = vld [vmem:[#allocation5 + $0x168] sm:$0xff]
        %v251 = vld [vmem:[#allocation5 + $0x170] sm:$0xff]
        %v252 = vld [vmem:[#allocation5 + $0x178] sm:$0xff]
        %v253 = vld [vmem:[#allocation5 + $0x180] sm:$0xff]
        %v254 = vld [vmem:[#allocation5 + $0x188] sm:$0xff]
        %v255 = vld [vmem:[#allocation5 + $0x190] sm:$0xff]
        %v256 = vld [vmem:[#allocation5 + $0x198] sm:$0xff]
        %v257 = vld [vmem:[#allocation5 + $0x1a0] sm:$0xff]
        %v258 = vld [vmem:[#allocation5 + $0x1a8] sm:$0xff]
        %v259 = vld [vmem:[#allocation5 + $0x1b0] sm:$0xff]
        %v260 = vld [vmem:[#allocation5 + $0x1b8] sm:$0xff]
        %v261 = vld [vmem:[#allocation5 + $0x1c0] sm:$0xff]
        %v262 = vld [vmem:[#allocation5 + $0x1c8] sm:$0xff]
        %v263 = vld [vmem:[#allocation5 + $0x1d0] sm:$0xff]
        %v264 = vld [vmem:[#allocation5 + $0x1d8] sm:$0xff]
        %v265 = vld [vmem:[#allocation5 + $0x1e0] sm:$0xff]
        %v266 = vld [vmem:[#allocation5 + $0x1e8] sm:$0xff]
        %v267 = vld [vmem:[#allocation5 + $0x1f0] sm:$0xff]
        %v268 = vld [vmem:[#allocation5 + $0x1f8] sm:$0xff]
        %v269 = vld [vmem:[#allocation5 + $0x200] sm:$0xff]
        %v270 = vld [vmem:[#allocation5 + $0x208] sm:$0xff]
        %v271 = vld [vmem:[#allocation5 + $0x210] sm:$0xff]
        %v272 = vld [vmem:[#allocation5 + $0x218] sm:$0xff]
        %v273 = vld [vmem:[#allocation5 + $0x220] sm:$0xff]
        %v274 = vld [vmem:[#allocation5 + $0x228] sm:$0xff]
        %v275 = vld [vmem:[#allocation5 + $0x230] sm:$0xff]
        %v276 = vld [vmem:[#allocation5 + $0x238] sm:$0xff]
        %v277 = vld [vmem:[#allocation5 + $0x240] sm:$0xff]
        %v278 = vld [vmem:[#allocation5 + $0x248] sm:$0xff]
        %v279 = vld [vmem:[#allocation5 + $0x250] sm:$0xff]
        %v280 = vld [vmem:[#allocation5 + $0x258] sm:$0xff]
        %v281 = vld [vmem:[#allocation5 + $0x260] sm:$0xff]
        %v282 = vld [vmem:[#allocation5 + $0x268] sm:$0xff]
        %v283 = vld [vmem:[#allocation5 + $0x270] sm:$0xff]
        %v284 = vld [vmem:[#allocation5 + $0x278] sm:$0xff]
        %v285 = vld [vmem:[#allocation5 + $0x280] sm:$0xff]
        %v286 = vld [vmem:[#allocation5 + $0x288] sm:$0xff]
        %v287 = vld [vmem:[#allocation5 + $0x290] sm:$0xff]
        %v288 = vld [vmem:[#allocation5 + $0x298] sm:$0xff]
        %v289 = vld [vmem:[#allocation5 + $0x2a0] sm:$0xff]
        %v290 = vld [vmem:[#allocation5 + $0x2a8] sm:$0xff]
        %v291 = vld [vmem:[#allocation5 + $0x2b0] sm:$0xff]
        %v292 = vld [vmem:[#allocation5 + $0x2b8] sm:$0xff]
        %v293 = vld [vmem:[#allocation5 + $0x2c0] sm:$0xff]
        %v294 = vld [vmem:[#allocation5 + $0x2c8] sm:$0xff]
        %v295 = vld [vmem:[#allocation5 + $0x2d0] sm:$0xff]
        %v296 = vld [vmem:[#allocation5 + $0x2d8] sm:$0xff]
        %v297 = vld [vmem:[#allocation5 + $0x2e0] sm:$0xff]
        %v298 = vld [vmem:[#allocation5 + $0x2e8] sm:$0xff]
        %v299 = vld [vmem:[#allocation5 + $0x2f0] sm:$0xff]
        %v300 = vld [vmem:[#allocation5 + $0x2f8] sm:$0xff]
        %v301 = vld [vmem:[#allocation5 + $0x300] sm:$0xff]
        %v302 = vld [vmem:[#allocation5 + $0x308] sm:$0xff]
        %v303 = vld [vmem:[#allocation5 + $0x310] sm:$0xff]
        %v304 = vld [vmem:[#allocation5 + $0x318] sm:$0xff]
        %v305 = vld [vmem:[#allocation5 + $0x320] sm:$0xff]
        %v306 = vld [vmem:[#allocation5 + $0x328] sm:$0xff]
        %v307 = vld [vmem:[#allocation5 + $0x330] sm:$0xff]
        %v308 = vld [vmem:[#allocation5 + $0x338] sm:$0xff]
        %v309 = vld [vmem:[#allocation5 + $0x340] sm:$0xff]
        %v310 = vld [vmem:[#allocation5 + $0x348] sm:$0xff]
        %v311 = vld [vmem:[#allocation5 + $0x350] sm:$0xff]
        %v312 = vld [vmem:[#allocation5 + $0x358] sm:$0xff]
        %v313 = vld [vmem:[#allocation5 + $0x360] sm:$0xff]
        %v314 = vld [vmem:[#allocation5 + $0x368] sm:$0xff]
        %v315 = vld [vmem:[#allocation5 + $0x370] sm:$0xff]
        %v316 = vld [vmem:[#allocation5 + $0x378] sm:$0xff]
        %v317 = vld [vmem:[#allocation5 + $0x380] sm:$0xff]
        %v318 = vld [vmem:[#allocation5 + $0x388] sm:$0xff]
        %v319 = vld [vmem:[#allocation5 + $0x390] sm:$0xff]
        %v320 = vld [vmem:[#allocation5 + $0x398] sm:$0xff]
        %v321 = vld [vmem:[#allocation5 + $0x3a0] sm:$0xff]
        %v322 = vld [vmem:[#allocation5 + $0x3a8] sm:$0xff]
        %v323 = vld [vmem:[#allocation5 + $0x3b0] sm:$0xff]
        %v324 = vld [vmem:[#allocation5 + $0x3b8] sm:$0xff]
        %v325 = vld [vmem:[#allocation5 + $0x3c0] sm:$0xff]
        %v326 = vld [vmem:[#allocation5 + $0x3c8] sm:$0xff]
        %v327 = vld [vmem:[#allocation5 + $0x3d0] sm:$0xff]
        %v328 = vld [vmem:[#allocation5 + $0x3d8] sm:$0xff]
        %v329 = vld [vmem:[#allocation5 + $0x3e0] sm:$0xff]
        %v330 = vld [vmem:[#allocation5 + $0x3e8] sm:$0xff]
        %v331 = vld [vmem:[#allocation5 + $0x3f0] sm:$0xff]
        %v332 = vld [vmem:[#allocation5 + $0x3f8] sm:$0xff]
        %v333 = vld [vmem:[#allocation5 + $0x400] sm:$0xff]
        %v334 = vld [vmem:[#allocation5 + $0x408] sm:$0xff]
        %v335 = vld [vmem:[#allocation5 + $0x410] sm:$0xff]
        %v336 = vld [vmem:[#allocation5 + $0x418] sm:$0xff]
        %v337 = vld [vmem:[#allocation5 + $0x420] sm:$0xff]
        %v338 = vld [vmem:[#allocation5 + $0x428] sm:$0xff]
        %v339 = vld [vmem:[#allocation5 + $0x430] sm:$0xff]
        %v340 = vld [vmem:[#allocation5 + $0x438] sm:$0xff]
        %v341 = vld [vmem:[#allocation5 + $0x440] sm:$0xff]
        %v342 = vld [vmem:[#allocation5 + $0x448] sm:$0xff]
        %v343 = vld [vmem:[#allocation5 + $0x450] sm:$0xff]
        %v344 = vld [vmem:[#allocation5 + $0x458] sm:$0xff]
        %v345 = vld [vmem:[#allocation5 + $0x460] sm:$0xff]
        %v346 = vld [vmem:[#allocation5 + $0x468] sm:$0xff]
        %v347 = vld [vmem:[#allocation5 + $0x470] sm:$0xff]
        %v348 = vld [vmem:[#allocation5 + $0x478] sm:$0xff]
        %v349 = vld [vmem:[#allocation5 + $0x480] sm:$0xff]
        %v350 = vld [vmem:[#allocation5 + $0x488] sm:$0xff]
        %v351 = vld [vmem:[#allocation5 + $0x490] sm:$0xff]
        %v352 = vld [vmem:[#allocation5 + $0x498] sm:$0xff]
        %v353 = vld [vmem:[#allocation5 + $0x4a0] sm:$0xff]
        %v354 = vld [vmem:[#allocation5 + $0x4a8] sm:$0xff]
        %v355 = vld [vmem:[#allocation5 + $0x4b0] sm:$0xff]
        %v356 = vld [vmem:[#allocation5 + $0x4b8] sm:$0xff]
        %v357 = vld [vmem:[#allocation5 + $0x4c0] sm:$0xff]
        %v358 = vld [vmem:[#allocation5 + $0x4c8] sm:$0xff]
        %v359 = vld [vmem:[#allocation5 + $0x4d0] sm:$0xff]
        %v360 = vld [vmem:[#allocation5 + $0x4d8] sm:$0xff]
        %v361 = vld [vmem:[#allocation5 + $0x4e0] sm:$0xff]
        %v362 = vld [vmem:[#allocation5 + $0x4e8] sm:$0xff]
        %v363 = vld [vmem:[#allocation5 + $0x4f0] sm:$0xff]
        %v364 = vld [vmem:[#allocation5 + $0x4f8] sm:$0xff]
        %v365 = vld [vmem:[#allocation5 + $0x500] sm:$0xff]
        %v366 = vld [vmem:[#allocation5 + $0x508] sm:$0xff]
        %v367 = vld [vmem:[#allocation5 + $0x510] sm:$0xff]
        %v368 = vld [vmem:[#allocation5 + $0x518] sm:$0xff]
        %v369 = vld [vmem:[#allocation5 + $0x520] sm:$0xff]
        %v370 = vld [vmem:[#allocation5 + $0x528] sm:$0xff]
        %v371 = vld [vmem:[#allocation5 + $0x530] sm:$0xff]
        %v372 = vld [vmem:[#allocation5 + $0x538] sm:$0xff]
        %v373 = vld [vmem:[#allocation5 + $0x540] sm:$0xff]
        %v374 = vld [vmem:[#allocation5 + $0x548] sm:$0xff]
        %v375 = vld [vmem:[#allocation5 + $0x550] sm:$0xff]
        %v376 = vld [vmem:[#allocation5 + $0x558] sm:$0xff]
        %v377 = vld [vmem:[#allocation5 + $0x560] sm:$0xff]
        %v378 = vld [vmem:[#allocation5 + $0x568] sm:$0xff]
        %v379 = vld [vmem:[#allocation5 + $0x570] sm:$0xff]
        %v380 = vld [vmem:[#allocation5 + $0x578] sm:$0xff]
        %v381 = vld [vmem:[#allocation5 + $0x580] sm:$0xff]
        %v382 = vld [vmem:[#allocation5 + $0x588] sm:$0xff]
        %v383 = vld [vmem:[#allocation5 + $0x590] sm:$0xff]
        %v384 = vld [vmem:[#allocation5 + $0x598] sm:$0xff]
        %v385 = vld [vmem:[#allocation5 + $0x5a0] sm:$0xff]
        %v386 = vld [vmem:[#allocation5 + $0x5a8] sm:$0xff]
        %v387 = vld [vmem:[#allocation5 + $0x5b0] sm:$0xff]
        %v388 = vld [vmem:[#allocation5 + $0x5b8] sm:$0xff]
        %v389 = vld [vmem:[#allocation5 + $0x5c0] sm:$0xff]
        %v390 = vld [vmem:[#allocation5 + $0x5c8] sm:$0xff]
        %v391 = vld [vmem:[#allocation5 + $0x5d0] sm:$0xff]
        %v392 = vld [vmem:[#allocation5 + $0x5d8] sm:$0xff]
        %v393 = vld [vmem:[#allocation5 + $0x5e0] sm:$0xff]
        %v394 = vld [vmem:[#allocation5 + $0x5e8] sm:$0xff]
        %v395 = vld [vmem:[#allocation5 + $0x5f0] sm:$0xff]
        %v396 = vld [vmem:[#allocation5 + $0x5f8] sm:$0xff]
        %v397 = vld [vmem:[#allocation5 + $0x600] sm:$0xff]
        %v398 = vld [vmem:[#allocation5 + $0x608] sm:$0xff]
        %v399 = vld [vmem:[#allocation5 + $0x610] sm:$0xff]
        %v400 = vld [vmem:[#allocation5 + $0x618] sm:$0xff]
        %v401 = vld [vmem:[#allocation5 + $0x620] sm:$0xff]
        %v402 = vld [vmem:[#allocation5 + $0x628] sm:$0xff]
        %v403 = vld [vmem:[#allocation5 + $0x630] sm:$0xff]
        %v404 = vld [vmem:[#allocation5 + $0x638] sm:$0xff]
        %v405 = vld [vmem:[#allocation5 + $0x640] sm:$0xff]
        %v406 = vld [vmem:[#allocation5 + $0x648] sm:$0xff]
        %v407 = vld [vmem:[#allocation5 + $0x650] sm:$0xff]
        %v408 = vld [vmem:[#allocation5 + $0x658] sm:$0xff]
        %v409 = vld [vmem:[#allocation5 + $0x660] sm:$0xff]
        %v410 = vld [vmem:[#allocation5 + $0x668] sm:$0xff]
        %v411 = vld [vmem:[#allocation5 + $0x670] sm:$0xff]
        %v412 = vld [vmem:[#allocation5 + $0x678] sm:$0xff]
        %v413 = vld [vmem:[#allocation5 + $0x680] sm:$0xff]
        %v414 = vld [vmem:[#allocation5 + $0x688] sm:$0xff]
        %v415 = vld [vmem:[#allocation5 + $0x690] sm:$0xff]
        %v416 = vld [vmem:[#allocation5 + $0x698] sm:$0xff]
        %v417 = vld [vmem:[#allocation5 + $0x6a0] sm:$0xff]
        %v418 = vld [vmem:[#allocation5 + $0x6a8] sm:$0xff]
        %v419 = vld [vmem:[#allocation5 + $0x6b0] sm:$0xff]
        %v420 = vld [vmem:[#allocation5 + $0x6b8] sm:$0xff]
        %v421 = vld [vmem:[#allocation5 + $0x6c0] sm:$0xff]
        %v422 = vld [vmem:[#allocation5 + $0x6c8] sm:$0xff]
        %v423 = vld [vmem:[#allocation5 + $0x6d0] sm:$0xff]
        %v424 = vld [vmem:[#allocation5 + $0x6d8] sm:$0xff]
        %v425 = vld [vmem:[#allocation5 + $0x6e0] sm:$0xff]
        %v426 = vld [vmem:[#allocation5 + $0x6e8] sm:$0xff]
        %v427 = vld [vmem:[#allocation5 + $0x6f0] sm:$0xff]
        %v428 = vld [vmem:[#allocation5 + $0x6f8] sm:$0xff]
        %v429 = vld [vmem:[#allocation5 + $0x700] sm:$0xff]
        %v430 = vld [vmem:[#allocation5 + $0x708] sm:$0xff]
        %v431 = vld [vmem:[#allocation5 + $0x710] sm:$0xff]
        %v432 = vld [vmem:[#allocation5 + $0x718] sm:$0xff]
        %v433 = vld [vmem:[#allocation5 + $0x720] sm:$0xff]
        %v434 = vld [vmem:[#allocation5 + $0x728] sm:$0xff]
        %v435 = vld [vmem:[#allocation5 + $0x730] sm:$0xff]
        %v436 = vld [vmem:[#allocation5 + $0x738] sm:$0xff]
        %v437 = vld [vmem:[#allocation5 + $0x740] sm:$0xff]
        %v438 = vld [vmem:[#allocation5 + $0x748] sm:$0xff]
        %v439 = vld [vmem:[#allocation5 + $0x750] sm:$0xff]
        %v440 = vld [vmem:[#allocation5 + $0x758] sm:$0xff]
        %v441 = vld [vmem:[#allocation5 + $0x760] sm:$0xff]
        %v442 = vld [vmem:[#allocation5 + $0x768] sm:$0xff]
        %v443 = vld [vmem:[#allocation5 + $0x770] sm:$0xff]
        %v444 = vld [vmem:[#allocation5 + $0x778] sm:$0xff]
        %v445 = vld [vmem:[#allocation5 + $0x780] sm:$0xff]
        %v446 = vld [vmem:[#allocation5 + $0x788] sm:$0xff]
        %v447 = vld [vmem:[#allocation5 + $0x790] sm:$0xff]
        %v448 = vld [vmem:[#allocation5 + $0x798] sm:$0xff]
        %v449 = vld [vmem:[#allocation5 + $0x7a0] sm:$0xff]
        %v450 = vld [vmem:[#allocation5 + $0x7a8] sm:$0xff]
        %v451 = vld [vmem:[#allocation5 + $0x7b0] sm:$0xff]
        %v452 = vld [vmem:[#allocation5 + $0x7b8] sm:$0xff]
        %v453 = vld [vmem:[#allocation5 + $0x7c0] sm:$0xff]
        %v454 = vld [vmem:[#allocation5 + $0x7c8] sm:$0xff]
        %v455 = vld [vmem:[#allocation5 + $0x7d0] sm:$0xff]
        %v456 = vld [vmem:[#allocation5 + $0x7d8] sm:$0xff]
        %v457 = vld [vmem:[#allocation5 + $0x7e0] sm:$0xff]
        %v458 = vld [vmem:[#allocation5 + $0x7e8] sm:$0xff]
        %v459 = vld [vmem:[#allocation5 + $0x7f0] sm:$0xff]
        %v460 = vld [vmem:[#allocation5 + $0x7f8] sm:$0xff]
        %461 = vmatpush.msra.mxu0 %v235
        %462 = vmatpush.msra.mxu0 %v233
        %463 = vmatpush.msra.mxu0 %v231
        %464 = vmatpush.msra.mxu0 %v229
        %465 = vmatpush.msra.mxu0 %v227
        %466 = vmatpush.msra.mxu0 %v225
        %467 = vmatpush.msra.mxu0 %v223
        %468 = vmatpush.msra.mxu0 %v221
        %469 = vmatpush.msra.mxu0 %v219
        %470 = vmatpush.msra.mxu0 %v217
        %471 = vmatpush.msra.mxu0 %v215
        %472 = vmatpush.msra.mxu0 %v213
        %473 = vmatpush.msra.mxu0 %v211
        %474 = vmatpush.msra.mxu0 %v209
        %475 = vmatpush.msra.mxu0 %v207
        %476 = vmatpush.msra.mxu0 %v205
        %477 = vmatmul.f32.gmra.mxu0 %v197
        %v478 = vpop.f32.mrf.mxu0
        %v479 = vadd.f32 -1.0, %v478
        %480 = vdwg.mxu0
        %481 = vmatpush.msra.mxu0 %v267
        %482 = vmatpush.msra.mxu0 %v265
        %483 = vmatpush.msra.mxu0 %v263
        %484 = vmatpush.msra.mxu0 %v261
        %485 = vmatpush.msra.mxu0 %v259
        %486 = vmatpush.msra.mxu0 %v257
        %487 = vmatpush.msra.mxu0 %v255
        %488 = vmatpush.msra.mxu0 %v253
        %489 = vmatpush.msra.mxu0 %v251
        %490 = vmatpush.msra.mxu0 %v249
        %491 = vmatpush.msra.mxu0 %v247
        %492 = vmatpush.msra.mxu0 %v245
        %493 = vmatpush.msra.mxu0 %v243
        %494 = vmatpush.msra.mxu0 %v241
        %495 = vmatpush.msra.mxu0 %v239
        %496 = vmatpush.msra.mxu0 %v237
        %497 = vmatmul.f32.gmra.mxu0 %v198
        %v498 = vpop.f32.mrf.mxu0
        %v499 = vadd.f32 %v479, %v498
        %500 = vdwg.mxu0
        %501 = vmatpush.msra.mxu0 %v299
        %502 = vmatpush.msra.mxu0 %v297
        %503 = vmatpush.msra.mxu0 %v295
        %504 = vmatpush.msra.mxu0 %v293
        %505 = vmatpush.msra.mxu0 %v291
        %506 = vmatpush.msra.mxu0 %v289
        %507 = vmatpush.msra.mxu0 %v287
        %508 = vmatpush.msra.mxu0 %v285
        %509 = vmatpush.msra.mxu0 %v283
        %510 = vmatpush.msra.mxu0 %v281
        %511 = vmatpush.msra.mxu0 %v279
        %512 = vmatpush.msra.mxu0 %v277
        %513 = vmatpush.msra.mxu0 %v275
        %514 = vmatpush.msra.mxu0 %v273
        %515 = vmatpush.msra.mxu0 %v271
        %516 = vmatpush.msra.mxu0 %v269
        %517 = vmatmul.f32.gmra.mxu0 %v199
        %v518 = vpop.f32.mrf.mxu0
        %v519 = vadd.f32 %v499, %v518
        %520 = vdwg.mxu0
        %521 = vmatpush.msra.mxu0 %v331
        %522 = vmatpush.msra.mxu0 %v329
        %523 = vmatpush.msra.mxu0 %v327
        %524 = vmatpush.msra.mxu0 %v325
        %525 = vmatpush.msra.mxu0 %v323
        %526 = vmatpush.msra.mxu0 %v321
        %527 = vmatpush.msra.mxu0 %v319
        %528 = vmatpush.msra.mxu0 %v317
        %529 = vmatpush.msra.mxu0 %v315
        %530 = vmatpush.msra.mxu0 %v313
        %531 = vmatpush.msra.mxu0 %v311
        %532 = vmatpush.msra.mxu0 %v309
        %533 = vmatpush.msra.mxu0 %v307
        %534 = vmatpush.msra.mxu0 %v305
        %535 = vmatpush.msra.mxu0 %v303
        %536 = vmatpush.msra.mxu0 %v301
        %537 = vmatmul.f32.gmra.mxu0 %v200
        %v538 = vpop.f32.mrf.mxu0
        %v539 = vadd.f32 %v519, %v538
        %540 = vdwg.mxu0
        %541 = vmatpush.msra.mxu0 %v363
        %542 = vmatpush.msra.mxu0 %v361
        %543 = vmatpush.msra.mxu0 %v359
        %544 = vmatpush.msra.mxu0 %v357
        %545 = vmatpush.msra.mxu0 %v355
        %546 = vmatpush.msra.mxu0 %v353
        %547 = vmatpush.msra.mxu0 %v351
        %548 = vmatpush.msra.mxu0 %v349
        %549 = vmatpush.msra.mxu0 %v347
        %550 = vmatpush.msra.mxu0 %v345
        %551 = vmatpush.msra.mxu0 %v343
        %552 = vmatpush.msra.mxu0 %v341
        %553 = vmatpush.msra.mxu0 %v339
        %554 = vmatpush.msra.mxu0 %v337
        %555 = vmatpush.msra.mxu0 %v335
        %556 = vmatpush.msra.mxu0 %v333
        %557 = vmatmul.f32.gmra.mxu0 %v201
        %v558 = vpop.f32.mrf.mxu0
        %v559 = vadd.f32 %v539, %v558
        %560 = vdwg.mxu0
        %561 = vmatpush.msra.mxu0 %v395
        %562 = vmatpush.msra.mxu0 %v393
        %563 = vmatpush.msra.mxu0 %v391
        %564 = vmatpush.msra.mxu0 %v389
        %565 = vmatpush.msra.mxu0 %v387
        %566 = vmatpush.msra.mxu0 %v385
        %567 = vmatpush.msra.mxu0 %v383
        %568 = vmatpush.msra.mxu0 %v381
        %569 = vmatpush.msra.mxu0 %v379
        %570 = vmatpush.msra.mxu0 %v377
        %571 = vmatpush.msra.mxu0 %v375
        %572 = vmatpush.msra.mxu0 %v373
        %573 = vmatpush.msra.mxu0 %v371
        %574 = vmatpush.msra.mxu0 %v369
        %575 = vmatpush.msra.mxu0 %v367
        %576 = vmatpush.msra.mxu0 %v365
        %577 = vmatmul.f32.gmra.mxu0 %v202
        %v578 = vpop.f32.mrf.mxu0
        %v579 = vadd.f32 %v559, %v578
        %580 = vdwg.mxu0
        %581 = vmatpush.msra.mxu0 %v427
        %582 = vmatpush.msra.mxu0 %v425
        %583 = vmatpush.msra.mxu0 %v423
        %584 = vmatpush.msra.mxu0 %v421
        %585 = vmatpush.msra.mxu0 %v419
        %586 = vmatpush.msra.mxu0 %v417
        %587 = vmatpush.msra.mxu0 %v415
        %588 = vmatpush.msra.mxu0 %v413
        %589 = vmatpush.msra.mxu0 %v411
        %590 = vmatpush.msra.mxu0 %v409
        %591 = vmatpush.msra.mxu0 %v407
        %592 = vmatpush.msra.mxu0 %v405
        %593 = vmatpush.msra.mxu0 %v403
        %594 = vmatpush.msra.mxu0 %v401
        %595 = vmatpush.msra.mxu0 %v399
        %596 = vmatpush.msra.mxu0 %v397
        %597 = vmatmul.f32.gmra.mxu0 %v203
        %v598 = vpop.f32.mrf.mxu0
        %v599 = vadd.f32 %v579, %v598
        %600 = vdwg.mxu0
        %601 = vmatpush.msra.mxu0 %v459
        %602 = vmatpush.msra.mxu0 %v457
        %603 = vmatpush.msra.mxu0 %v455
        %604 = vmatpush.msra.mxu0 %v453
        %605 = vmatpush.msra.mxu0 %v451
        %606 = vmatpush.msra.mxu0 %v449
        %607 = vmatpush.msra.mxu0 %v447
        %608 = vmatpush.msra.mxu0 %v445
        %609 = vmatpush.msra.mxu0 %v443
        %610 = vmatpush.msra.mxu0 %v441
        %611 = vmatpush.msra.mxu0 %v439
        %612 = vmatpush.msra.mxu0 %v437
        %613 = vmatpush.msra.mxu0 %v435
        %614 = vmatpush.msra.mxu0 %v433
        %615 = vmatpush.msra.mxu0 %v431
        %616 = vmatpush.msra.mxu0 %v429
        %617 = vmatmul.f32.gmra.mxu0 %v204
        %v618 = vpop.f32.mrf.mxu0
        %v619 = vadd.f32 %v599, %v618
        %620 = vdwg.mxu0
        %621 = vmatpush.msra.mxu0 %v236
        %622 = vmatpush.msra.mxu0 %v234
        %623 = vmatpush.msra.mxu0 %v232
        %624 = vmatpush.msra.mxu0 %v230
        %625 = vmatpush.msra.mxu0 %v228
        %626 = vmatpush.msra.mxu0 %v226
        %627 = vmatpush.msra.mxu0 %v224
        %628 = vmatpush.msra.mxu0 %v222
        %629 = vmatpush.msra.mxu0 %v220
        %630 = vmatpush.msra.mxu0 %v218
        %631 = vmatpush.msra.mxu0 %v216
        %632 = vmatpush.msra.mxu0 %v214
        %633 = vmatpush.msra.mxu0 %v212
        %634 = vmatpush.msra.mxu0 %v210
        %635 = vmatpush.msra.mxu0 %v208
        %636 = vmatpush.msra.mxu0 %v206
        %637 = vmatmul.f32.gmra.mxu0 %v197
        %v638 = vpop.f32.mrf.mxu0
        %v639 = vadd.f32 -1.0, %v638
        %640 = vdwg.mxu0
        %641 = vmatpush.msra.mxu0 %v268
        %642 = vmatpush.msra.mxu0 %v266
        %643 = vmatpush.msra.mxu0 %v264
        %644 = vmatpush.msra.mxu0 %v262
        %645 = vmatpush.msra.mxu0 %v260
        %646 = vmatpush.msra.mxu0 %v258
        %647 = vmatpush.msra.mxu0 %v256
        %648 = vmatpush.msra.mxu0 %v254
        %649 = vmatpush.msra.mxu0 %v252
        %650 = vmatpush.msra.mxu0 %v250
        %651 = vmatpush.msra.mxu0 %v248
        %652 = vmatpush.msra.mxu0 %v246
        %653 = vmatpush.msra.mxu0 %v244
        %654 = vmatpush.msra.mxu0 %v242
        %655 = vmatpush.msra.mxu0 %v240
        %656 = vmatpush.msra.mxu0 %v238
        %657 = vmatmul.f32.gmra.mxu0 %v198
        %v658 = vpop.f32.mrf.mxu0
        %v659 = vadd.f32 %v639, %v658
        %660 = vdwg.mxu0
        %661 = vmatpush.msra.mxu0 %v300
        %662 = vmatpush.msra.mxu0 %v298
        %663 = vmatpush.msra.mxu0 %v296
        %664 = vmatpush.msra.mxu0 %v294
        %665 = vmatpush.msra.mxu0 %v292
        %666 = vmatpush.msra.mxu0 %v290
        %667 = vmatpush.msra.mxu0 %v288
        %668 = vmatpush.msra.mxu0 %v286
        %669 = vmatpush.msra.mxu0 %v284
        %670 = vmatpush.msra.mxu0 %v282
        %671 = vmatpush.msra.mxu0 %v280
        %672 = vmatpush.msra.mxu0 %v278
        %673 = vmatpush.msra.mxu0 %v276
        %674 = vmatpush.msra.mxu0 %v274
        %675 = vmatpush.msra.mxu0 %v272
        %676 = vmatpush.msra.mxu0 %v270
        %677 = vmatmul.f32.gmra.mxu0 %v199
        %v678 = vpop.f32.mrf.mxu0
        %v679 = vadd.f32 %v659, %v678
        %680 = vdwg.mxu0
        %681 = vmatpush.msra.mxu0 %v332
        %682 = vmatpush.msra.mxu0 %v330
        %683 = vmatpush.msra.mxu0 %v328
        %684 = vmatpush.msra.mxu0 %v326
        %685 = vmatpush.msra.mxu0 %v324
        %686 = vmatpush.msra.mxu0 %v322
        %687 = vmatpush.msra.mxu0 %v320
        %688 = vmatpush.msra.mxu0 %v318
        %689 = vmatpush.msra.mxu0 %v316
        %690 = vmatpush.msra.mxu0 %v314
        %691 = vmatpush.msra.mxu0 %v312
        %692 = vmatpush.msra.mxu0 %v310
        %693 = vmatpush.msra.mxu0 %v308
        %694 = vmatpush.msra.mxu0 %v306
        %695 = vmatpush.msra.mxu0 %v304
        %696 = vmatpush.msra.mxu0 %v302
        %697 = vmatmul.f32.gmra.mxu0 %v200
        %v698 = vpop.f32.mrf.mxu0
        %v699 = vadd.f32 %v679, %v698
        %700 = vdwg.mxu0
        %701 = vmatpush.msra.mxu0 %v364
        %702 = vmatpush.msra.mxu0 %v362
        %703 = vmatpush.msra.mxu0 %v360
        %704 = vmatpush.msra.mxu0 %v358
        %705 = vmatpush.msra.mxu0 %v356
        %706 = vmatpush.msra.mxu0 %v354
        %707 = vmatpush.msra.mxu0 %v352
        %708 = vmatpush.msra.mxu0 %v350
        %709 = vmatpush.msra.mxu0 %v348
        %710 = vmatpush.msra.mxu0 %v346
        %711 = vmatpush.msra.mxu0 %v344
        %712 = vmatpush.msra.mxu0 %v342
        %713 = vmatpush.msra.mxu0 %v340
        %714 = vmatpush.msra.mxu0 %v338
        %715 = vmatpush.msra.mxu0 %v336
        %716 = vmatpush.msra.mxu0 %v334
        %717 = vmatmul.f32.gmra.mxu0 %v201
        %v718 = vpop.f32.mrf.mxu0
        %v719 = vadd.f32 %v699, %v718
        %720 = vdwg.mxu0
        %721 = vmatpush.msra.mxu0 %v396
        %722 = vmatpush.msra.mxu0 %v394
        %723 = vmatpush.msra.mxu0 %v392
        %724 = vmatpush.msra.mxu0 %v390
        %725 = vmatpush.msra.mxu0 %v388
        %726 = vmatpush.msra.mxu0 %v386
        %727 = vmatpush.msra.mxu0 %v384
        %728 = vmatpush.msra.mxu0 %v382
        %729 = vmatpush.msra.mxu0 %v380
        %730 = vmatpush.msra.mxu0 %v378
        %731 = vmatpush.msra.mxu0 %v376
        %732 = vmatpush.msra.mxu0 %v374
        %733 = vmatpush.msra.mxu0 %v372
        %734 = vmatpush.msra.mxu0 %v370
        %735 = vmatpush.msra.mxu0 %v368
        %736 = vmatpush.msra.mxu0 %v366
        %737 = vmatmul.f32.gmra.mxu0 %v202
        %v738 = vpop.f32.mrf.mxu0
        %v739 = vadd.f32 %v719, %v738
        %740 = vdwg.mxu0
        %741 = vmatpush.msra.mxu0 %v428
        %742 = vmatpush.msra.mxu0 %v426
        %743 = vmatpush.msra.mxu0 %v424
        %744 = vmatpush.msra.mxu0 %v422
        %745 = vmatpush.msra.mxu0 %v420
        %746 = vmatpush.msra.mxu0 %v418
        %747 = vmatpush.msra.mxu0 %v416
        %748 = vmatpush.msra.mxu0 %v414
        %749 = vmatpush.msra.mxu0 %v412
        %750 = vmatpush.msra.mxu0 %v410
        %751 = vmatpush.msra.mxu0 %v408
        %752 = vmatpush.msra.mxu0 %v406
        %753 = vmatpush.msra.mxu0 %v404
        %754 = vmatpush.msra.mxu0 %v402
        %755 = vmatpush.msra.mxu0 %v400
        %756 = vmatpush.msra.mxu0 %v398
        %757 = vmatmul.f32.gmra.mxu0 %v203
        %v758 = vpop.f32.mrf.mxu0
        %v759 = vadd.f32 %v739, %v758
        %760 = vdwg.mxu0
        %761 = vmatpush.msra.mxu0 %v460
        %762 = vmatpush.msra.mxu0 %v458
        %763 = vmatpush.msra.mxu0 %v456
        %764 = vmatpush.msra.mxu0 %v454
        %765 = vmatpush.msra.mxu0 %v452
        %766 = vmatpush.msra.mxu0 %v450
        %767 = vmatpush.msra.mxu0 %v448
        %768 = vmatpush.msra.mxu0 %v446
        %769 = vmatpush.msra.mxu0 %v444
        %770 = vmatpush.msra.mxu0 %v442
        %771 = vmatpush.msra.mxu0 %v440
        %772 = vmatpush.msra.mxu0 %v438
        %773 = vmatpush.msra.mxu0 %v436
        %774 = vmatpush.msra.mxu0 %v434
        %775 = vmatpush.msra.mxu0 %v432
        %776 = vmatpush.msra.mxu0 %v430
        %777 = vmatmul.f32.gmra.mxu0 %v204
        %v778 = vpop.f32.mrf.mxu0
        %v779 = vadd.f32 %v759, %v778
        %780 = vdwg.mxu0
        %781 = vst [vmem:[%s178] sm:$0xff] %v619
        %782 = vst [vmem:[%s178 + $0x8] sm:$0xff] %v779
        %s783 = sand.u32 %s75, 1
        %s784 = scalar_lea.sflag [#allocation4], %s783
        %s785 = sand.u32 %s75, 1
        %s786 = smul.addr %s785, 16
        %s787 = scalar_lea.vmem [#allocation7], %s786
        // Predicated region
        $region37: #{tpu_custom_call.1} parent=27 // pred_check
          %p788 = pneg %p85
        $region38: #{tpu_custom_call.1} parent=27 // pred_check_branch
          %790 = sbr.rel (%p788) target = $region40
        $region39: #{tpu_custom_call.1} parent=27 // pred_region
          %792 = vsyncadd %s784, 0
          %s793 = smul.addr %s20, 2
          %s794 = smul.addr %s793, 8
          %s795 = scalar_lea.hbm %s2, %s794
          %s797 = sshll.u32 %s787, 4
          %s798 = int_to_ptr.vmem [resolvable:$true] %s797
          %s799 = sshll.u32 %s795, 4
          %s800 = int_to_ptr.hbm [resolvable:$true] %s799
          %802 = dma.vmem_to_hbm [thread:$0]  %s798, 256, %s800, %s784
        $region40: #{tpu_custom_call.1} parent=27 // pred_fallthru
          _
      $region28: #{tpu_custom_call.1} parent=5 // pred_fallthru
        _
      %p803 = scmp.le.s32.totalorder 2, %s15
      // Predicated region
      $region41: #{tpu_custom_call.1} parent=5 // pred_check
        %p804 = pneg %p803
      $region42: #{tpu_custom_call.1} parent=5 // pred_check_branch
        %806 = sbr.rel (%p804) target = $region44
      $region43: #{tpu_custom_call.1} parent=5 // pred_region
        %s807 = ssub.s32 %s15, 2
        // Predicated region
        $region45: #{tpu_custom_call.1} parent=43 // pred_check
          %p808 = pneg %p91
        $region46: #{tpu_custom_call.1} parent=43 // pred_check_branch
          %810 = sbr.rel (%p808) target = $region48
        $region47: #{tpu_custom_call.1} parent=43 // pred_region
          %s811 = sand.u32 %s76, 1
          %s812 = scalar_lea.sflag [#allocation4], %s811
          %s813 = sand.u32 %s76, 1
          %s814 = smul.addr %s813, 16
          %s815 = scalar_lea.vmem [#allocation7], %s814
          %817 = dma.done %s812, 256
        $region48: #{tpu_custom_call.1} parent=43 // pred_fallthru
          _
      $region44: #{tpu_custom_call.1} parent=5 // pred_fallthru
        _
    $region6: #{tpu_custom_call.1} parent=1 // loop_footer
      %s19 = sadd.s32 1, %s15
    $region7: #{tpu_custom_call.1} parent=1 // loop_footer_branch
      %14 = sbr.rel target = $region3
    $region8: #{tpu_custom_call.1} parent=1 // loop_exit
      _
    %818 = vsyncpa [#allocation3], 1
    %s819 = scalar_lea.sflag [#allocation3], 1
    %820 = vsyncpa %s819, 1
    %821 = vsyncpa [#allocation6], 1
    %822 = vsyncpa [#allocation4], 1
    %s823 = scalar_lea.sflag [#allocation4], 1
    %824 = vsyncpa %s823, 1

</llo_original>
